<compile_context>
chip_gen: v7x
topology: tpu7x:2x2x1
jax: 0.10.0
libtpu: 0.0.40
codegen_flags: <defaults>
</compile_context>

<pallas_src>
import math

import jax
import jax.numpy as jnp
from jax.experimental import pallas as pl
from jax.experimental.pallas import tpu as pltpu


def _sinusoidal_kernel(inv_k_ref, off_ref, out_ref):
    # inv_k_ref, off_ref: (1, dim_f) f32 resident vectors; out_ref: (tile_rows, dim_f) f32.
    tile_rows, dim_f = out_ref.shape
    row0 = pl.program_id(0) * tile_rows
    fold_row = (
        jax.lax.broadcasted_iota(jnp.int32, (tile_rows, dim_f), 0) + row0
    ).astype(jnp.float32)
    # seq row t = fold_row*k + lane//dim ;  emb[t, lane%dim] = t * inv_full[lane%dim]
    #           = fold_row*(k*inv_full) + (lane//dim)*inv_full  -> single FMA per vreg,
    # then one lane-dense full-width store.
    out_ref[...] = fold_row * inv_k_ref[...] + off_ref[...]


def make_inv_freq(dim: int) -> jnp.ndarray:
    # Deterministic buffer init, matching the PyTorch __init__.
    return (1.0 / (10000.0 ** (jnp.arange(0, dim, 2, dtype=jnp.float32) / dim))).astype(
        jnp.float32
    )


def _vmem_budget_bytes() -> int:
    """Budget for the double-buffered f32 output tile, gated on the device."""
    try:
        cap = pltpu.get_tpu_info().vmem_capacity_bytes
    except Exception:
        cap = 64 << 20  # unknown -> assume the smallest (v7x-like) and stay safe
    # v7x: 64 MiB physical VMEM per TC -> keep buffers <= ~24 MiB.
    # v5e/v6e: 128 MiB -> push to 48 MiB for very long sequences.
    return (24 << 20) if cap <= (64 << 20) else (48 << 20)


def _choose_tile_rows(n_rows: int, dim_f: int, budget_bytes: int) -> int:
    # The double-buffered f32 output tile is the only meaningful VMEM consumer:
    # 2 * tile_rows * dim_f * 4 bytes must fit the budget.  No artificial row cap.
    max_rows = max(8, budget_bytes // (2 * dim_f * 4))
    tile = min(n_rows, max_rows)
    if tile < n_rows:
        tile = max(8, (tile // 8) * 8)  # sublane-aligned when actually tiled
    return tile


def sinusoidal_embeddings(
    x: jnp.ndarray, inv_freq: jnp.ndarray, *, vmem_budget_bytes: int | None = None
) -> jnp.ndarray:
    n = x.shape[-2]
    half = inv_freq.shape[0]
    dim = 2 * half

    # Fold k rows into the lane axis so the stored last dim is a multiple of 128.
    # Padding the folded row count keeps stores lane-dense for *every* n.
    k = 1 if dim % 128 == 0 else 128 // math.gcd(dim, 128)
    n_f = (n + k - 1) // k
    dim_f = dim * k

    inv_full = jnp.concatenate([inv_freq, inv_freq]).astype(jnp.float32)  # (dim,)
    inv_tiled = jnp.tile(inv_full, (k,))                                   # (dim_f,)
    inv_k = (float(k) * inv_tiled).reshape(1, dim_f)
    off = (jnp.repeat(jnp.arange(k, dtype=jnp.float32), dim) * inv_tiled).reshape(1, dim_f)

    budget = _vmem_budget_bytes() if vmem_budget_bytes is None else vmem_budget_bytes
    tile_rows = _choose_tile_rows(n_f, dim_f, budget)
    grid = (pl.cdiv(n_f, tile_rows),)

    # Derive the compiler VMEM limit from the actual allocation (+ slack) so the
    # tile chooser and the compiler agree; this is what unlocks >1024-row tiles
    # past v5e's 16 MiB default scoped limit while staying safe on v7x's 64 MiB.
    out_bytes = 2 * tile_rows * dim_f * 4       # double-buffered output tile
    in_bytes = 2 * 2 * dim_f * 4                # two (1, dim_f) resident inputs
    vmem_limit = int(max(out_bytes + in_bytes + (2 << 20), 8 << 20))

    emb_f = pl.pallas_call(
        _sinusoidal_kernel,
        out_shape=jax.ShapeDtypeStruct((n_f, dim_f), jnp.float32),
        grid=grid,
        in_specs=[
            pl.BlockSpec((1, dim_f), lambda i: (0, 0)),  # inv_k, resident
            pl.BlockSpec((1, dim_f), lambda i: (0, 0)),  # off, resident
        ],
        out_specs=pl.BlockSpec((tile_rows, dim_f), lambda i: (i, 0)),
        compiler_params=pltpu.CompilerParams(
            dimension_semantics=("parallel",),  # megacore row-tile sharding
            vmem_limit_bytes=vmem_limit,
        ),
    )(inv_k, off)

    # (n_f, dim*k) row-major is exactly (n_f*k, dim); drop row padding, add batch dim.
    return emb_f.reshape(n_f * k, dim)[:n][None, :, :]


def _reference(n: int, inv_freq: jnp.ndarray) -> jnp.ndarray:
    t = jnp.arange(n, dtype=jnp.float32)
    freqs = jnp.einsum("i,j->ij", t, inv_freq)
    return jnp.concatenate([freqs, freqs], axis=-1)[None, :, :]


if __name__ == "__main__":
    key = jax.random.PRNGKey(0)

    # 1) Small shapes consistent with the module's forward: x is (batch, seq, dim).
    batch, n, dim = 2, 8, 32
    x = jax.random.normal(key, (batch, n, dim), dtype=jnp.float32)
    inv_freq = make_inv_freq(dim)

    emb = jax.block_until_ready(sinusoidal_embeddings(x, inv_freq))
    ref = _reference(n, inv_freq)
    assert emb.shape == (1, n, dim), emb.shape
    assert emb.dtype == jnp.float32
    assert jnp.allclose(emb, ref, rtol=1e-6, atol=1e-6), "mismatch (small case)"

    # 2) Row-tiled case (grid > 1 via a deliberately small budget) with dim=64 folding.
    n2, dim2 = 4096, 64
    x2 = jax.random.normal(jax.random.PRNGKey(1), (1, n2, dim2), dtype=jnp.float32)
    inv_freq2 = make_inv_freq(dim2)
    emb2 = jax.block_until_ready(
        sinusoidal_embeddings(x2, inv_freq2, vmem_budget_bytes=1 << 20)
    )
    ref2 = _reference(n2, inv_freq2)
    assert emb2.shape == (1, n2, dim2), emb2.shape
    assert jnp.allclose(emb2, ref2, rtol=1e-5, atol=1e-4), "mismatch (tiled case)"

    # 3) n not divisible by the fold factor k: exercises the padded lane-dense path.
    n3, dim3 = 1000, 32
    x3 = jax.random.normal(jax.random.PRNGKey(2), (1, n3, dim3), dtype=jnp.float32)
    inv_freq3 = make_inv_freq(dim3)
    emb3 = jax.block_until_ready(sinusoidal_embeddings(x3, inv_freq3))
    ref3 = _reference(n3, inv_freq3)
    assert emb3.shape == (1, n3, dim3), emb3.shape
    assert jnp.allclose(emb3, ref3, rtol=1e-5, atol=1e-4), "mismatch (padded case)"

    print("KERNEL_OK")
</pallas_src>

<mosaic_0001>
module attributes {stable_mosaic.version = 11 : i64} {
  func.func @_sinusoidal_kernel(%arg0: i32, %arg1: memref<1x128xf32, #tpu.memory_space<vmem>>, %arg2: memref<1x128xf32, #tpu.memory_space<vmem>>, %arg3: memref<2x128xf32, #tpu.memory_space<vmem>>) attributes {dimension_semantics = [#tpu.dimension_semantics<parallel>], iteration_bounds = array<i64: 1>, scalar_prefetch = 0 : i64, scratch_operands = 0 : i64, tpu.core_type = #tpu.core_type<tc>, window_params = [{pipeline_mode = #tpu.pipeline_mode<synchronous>, transform_indices = @transform_0, window_bounds = array<i64: 1, 128>}, {pipeline_mode = #tpu.pipeline_mode<synchronous>, transform_indices = @transform_1, window_bounds = array<i64: 1, 128>}, {transform_indices = @transform_2, window_bounds = array<i64: 2, 128>}]} {
    %c2_i32 = arith.constant 2 : i32
    %0 = arith.muli %arg0, %c2_i32 : i32
    %1 = tpu.iota {dimensions = array<i32: 0>} : vector<2x128xi32>
    %2 = vector.broadcast %0 : i32 to vector<2x128xi32>
    %3 = arith.addi %1, %2 : vector<2x128xi32>
    %4 = arith.sitofp %3 : vector<2x128xi32> to vector<2x128xf32>
    %c0 = arith.constant 0 : index
    %c0_0 = arith.constant 0 : index
    %5 = vector.load %arg1[%c0, %c0_0] : memref<1x128xf32, #tpu.memory_space<vmem>>, vector<1x128xf32>
    %6 = vector.broadcast %5 : vector<1x128xf32> to vector<2x128xf32>
    %7 = arith.mulf %4, %6 : vector<2x128xf32>
    %c0_1 = arith.constant 0 : index
    %c0_2 = arith.constant 0 : index
    %8 = vector.load %arg2[%c0_1, %c0_2] : memref<1x128xf32, #tpu.memory_space<vmem>>, vector<1x128xf32>
    %9 = vector.broadcast %8 : vector<1x128xf32> to vector<2x128xf32>
    %10 = arith.addf %7, %9 : vector<2x128xf32>
    %c0_3 = arith.constant 0 : index
    %c0_4 = arith.constant 0 : index
    %11 = vector.load %arg3[%c0_3, %c0_4] : memref<2x128xf32, #tpu.memory_space<vmem>>, vector<2x128xf32>
    tpu.vector_store %arg3[%c0_3, %c0_4], %10 {strides = array<i32>} : memref<2x128xf32, #tpu.memory_space<vmem>>, vector<2x128xf32>,
    return
  }
  func.func @transform_0(%arg0: i32) -> (i32, i32) {
    %c0_i32 = arith.constant 0 : i32
    %c0_i32_0 = arith.constant 0 : i32
    %c0_i32_1 = arith.constant 0 : i32
    return %c0_i32, %c0_i32_0 : i32, i32
  }
  func.func @transform_1(%arg0: i32) -> (i32, i32) {
    %c0_i32 = arith.constant 0 : i32
    %c0_i32_0 = arith.constant 0 : i32
    %c0_i32_1 = arith.constant 0 : i32
    return %c0_i32, %c0_i32_0 : i32, i32
  }
  func.func @transform_2(%arg0: i32) -> (i32, i32) {
    %c0_i32 = arith.constant 0 : i32
    %c0_i32_0 = arith.constant 0 : i32
    return %arg0, %c0_i32 : i32, i32
  }
}

</mosaic_0001>

<llo_original>
// kernel: tpu_custom_call.1
$region0: #{tpu_custom_call.1}
  #allocation0 [shape = 'u32[]', space=smem, size = 0x4, offset = 0x4, fixed_abs, tag = 'smem constant byte address 0x4 - core index']
  #allocation1 [shape = 'u32[144,128]{1,0:T(1,128)}', space=vmem, size = 0x12000, scoped, tag = 'internal scratch']
  %s0 = inlined_call_operand.hbm [shape: f32[1,128], index: 0, kind: input, shape index: {}]
  %s1 = inlined_call_operand.vmem [shape: f32[1,128], index: 1, kind: input, shape index: {}]
  %s2 = inlined_call_operand.hbm [shape: f32[2,128], index: 2, kind: output, shape index: {}]
  %s3 = sld [smem:[#allocation0]]
  $region22: #{tpu_custom_call.1} parent=0
    _
  %s5 = ssub.s32 1, %s3
  %s6 = scalar_select 0, %s5, %s3
  $region1: #{tpu_custom_call.1} parent=0
    #allocation2 [shape = 'u8[512]{0}', space=vmem, size = 0x400, scoped, tag = 'input window, operand 0, single buffered']
    #allocation3 [shape = 's32[1]{0}', space=sflag, size = 0x4, scoped, tag = 'scoped memory for tpu_custom_call.1']
    #allocation4 [shape = 's32[1]{0}', space=sflag, size = 0x4, scoped, tag = 'scoped memory for tpu_custom_call.1']
    #allocation5 [shape = 'u8[1024]{0}', space=vmem, size = 0x400, scoped, tag = 'output window, operand 0, single buffered']
    %7 = vsyncpa [#allocation3], 0
    %8 = vsyncpa [#allocation4], 0
    // Predicated region
    $region2: #{tpu_custom_call.1} parent=1 // pred_check
      _
    $region3: #{tpu_custom_call.1} parent=1 // pred_check_branch
      %10 = sbr.rel (0) target = $region5
    $region4: #{tpu_custom_call.1} parent=1 // pred_region
      %s12 = ssub.s32 16, 16
      %13 = vsyncadd [#allocation3], %s12
      %s15 = sshll.u32 [#allocation2], 4
      %s16 = int_to_ptr.vmem [resolvable:$true] %s15
      %18 = dma.hbm_to_vmem [thread:$0]  %s0, 16, %s16, [#allocation3]
    $region5: #{tpu_custom_call.1} parent=1 // pred_fallthru
      _
    // Predicated region
    $region6: #{tpu_custom_call.1} parent=1 // pred_check
      _
    $region7: #{tpu_custom_call.1} parent=1 // pred_check_branch
      %20 = sbr.rel (0) target = $region9
    $region8: #{tpu_custom_call.1} parent=1 // pred_region
      _
    $region9: #{tpu_custom_call.1} parent=1 // pred_fallthru
      _
    // Predicated region
    $region10: #{tpu_custom_call.1} parent=1 // pred_check
      _
    $region11: #{tpu_custom_call.1} parent=1 // pred_check_branch
      %22 = sbr.rel (0) target = $region13
    $region12: #{tpu_custom_call.1} parent=1 // pred_region
      %23 = dma.done [#allocation3], 16
    $region13: #{tpu_custom_call.1} parent=1 // pred_fallthru
      _
    %s24 = smul.u32 0, 2
    %v25 = vlaneseq
    %v26 = vshrl.u32 %v25, 7
    %v27 = vstv %s24
    %v28 = vadd.s32 %v26, %v27
    %v29 = vcvt.s32.f32 %v28
    %v30 = vld [vmem:[#allocation2] sm:$0x1]
    %v32 = vlaneseq
    %v33 = vshrl.u32 %v32, 7
    %v34 = vsub.s32 0, %v33
    %v35 = vrot.slane %v30, %v34
    %v37 = vmul.f32 %v29, %v35
    %v38 = vld [vmem:[%s1] sm:$0x1]
    %v40 = vlaneseq
    %v41 = vshrl.u32 %v40, 7
    %v42 = vsub.s32 0, %v41
    %v43 = vrot.slane %v38, %v42
    %v45 = vadd.f32 %v37, %v43
    %46 = vst [vmem:[#allocation5] sm:$0x3] %v45
    // Predicated region
    $region14: #{tpu_custom_call.1} parent=1 // pred_check
      _
    $region15: #{tpu_custom_call.1} parent=1 // pred_check_branch
      %48 = sbr.rel (0) target = $region17
    $region16: #{tpu_custom_call.1} parent=1 // pred_region
      %s50 = ssub.s32 32, 32
      %51 = vsyncadd [#allocation4], %s50
      %s53 = sshll.u32 [#allocation5], 4
      %s54 = int_to_ptr.vmem [resolvable:$true] %s53
      %56 = dma.vmem_to_hbm [thread:$0]  %s54, 32, %s2, [#allocation4]
    $region17: #{tpu_custom_call.1} parent=1 // pred_fallthru
      _
    // Predicated region
    $region18: #{tpu_custom_call.1} parent=1 // pred_check
      _
    $region19: #{tpu_custom_call.1} parent=1 // pred_check_branch
      %58 = sbr.rel (0) target = $region21
    $region20: #{tpu_custom_call.1} parent=1 // pred_region
      %59 = dma.done [#allocation4], 32
    $region21: #{tpu_custom_call.1} parent=1 // pred_fallthru
      _
    %60 = vsyncpa [#allocation3], 1
    %61 = vsyncpa [#allocation4], 1

</llo_original>
